<compile_context>
chip_gen: v7x
topology: tpu7x:2x2x1
jax: 0.10.0
libtpu: 0.0.40
codegen_flags: <defaults>
</compile_context>

<pallas_src>
import jax
import jax.numpy as jnp
from jax.experimental import pallas as pl
from jax.experimental.pallas import tpu as pltpu

NUM_RULES = 256
HIDDEN = 20
DEC_W = 384          # 3 * 128 lanes: rule in 0:256, state in lane 256, zero-padded


# ----------------------------------------------------------------------------
# Kernel 1: forward_net  ==  Linear(3,10) -> ReLU -> Linear(10,1) -> Sigmoid
# All params arrive as ONE packed [6, 10] slab (w1 rows 0:3, b1 row 3,
# w2-as-row row 4, b2 in row 5 lane 0).  All contractions on the VPU/XLU.
# ----------------------------------------------------------------------------
def _forward_net_kernel(x_ref, p_ref, out_ref):
    x = x_ref[...]                                   # [B, 3]
    p = p_ref[...]                                   # [6, 10] packed params
    w1 = p[0:3, :]                                   # [3, 10]
    b1 = p[3:4, :]                                   # [1, 10]
    w2 = p[4:5, :]                                   # [1, 10]
    b2 = p[5:6, 0:1]                                 # [1, 1]
    # Layer 1: K=3 contraction unrolled as 3 broadcast FMAs.
    h = b1 + x[:, 0:1] * w1[0:1, :] + x[:, 1:2] * w1[1:2, :] + x[:, 2:3] * w1[2:3, :]
    h = jnp.maximum(h, 0.0)                          # ReLU
    # Layer 2: K=10 contraction = elementwise multiply + lane reduce.
    y = jnp.sum(h * w2, axis=-1, keepdims=True) + b2
    out_ref[...] = jax.nn.sigmoid(y)                 # Sigmoid  (single [B,1] output)


def forward_net(params, x):
    B = x.shape[0]
    packed = jnp.concatenate(
        [params["w1"], params["b1"], params["w2"],
         jnp.pad(params["b2"], ((0, 0), (0, 9)))], axis=0).astype(jnp.float32)  # [6, 10]
    vmem = pl.BlockSpec(memory_space=pltpu.MemorySpace.VMEM)
    return pl.pallas_call(
        _forward_net_kernel,
        out_shape=jax.ShapeDtypeStruct((B, 1), jnp.float32),
        in_specs=[vmem, vmem],
        out_specs=vmem,
    )(x, packed)


# ----------------------------------------------------------------------------
# Kernel 2: LSTM encoder (input=1, hidden=20) + fused decoder heads.
# Inputs:
#   seq_ref  : [B, T]          sequence (trailing unit dim dropped wrapper-side)
#   lstm_ref : [H+2, 4H]       rows 0:H = W_hh, row H = W_ih, row H+1 = b_ih+b_hh
#                              (gate order permuted to [i, f, o, g])
#   dec_ref  : [H+1, 384]      rows 0:H = fused decoder weight, row H = fused bias
#                              (lanes 0:256 = rule head, lane 256 = state head)
# Output:
#   out_ref  : [B, 384]        lane-dense fused decoder slab, split wrapper-side
# ----------------------------------------------------------------------------
def _lstm_decode_kernel(seq_ref, lstm_ref, dec_ref, out_ref):
    H = HIDDEN
    B, T = seq_ref.shape
    G = 4 * H

    seq = seq_ref[...]                               # [B, T]
    lp = lstm_ref[...]                               # [H+2, 4H]
    w_hh = lp[0:H, :]                                # [H, 4H]
    w_ih = lp[H:H + 1, :]                            # [1, 4H]
    b = lp[H + 1:H + 2, :]                           # [1, 4H]

    # Hoist loop-invariant broadcasts (JAX does not CSE broadcast_in_dim).
    w_ih_b = jnp.broadcast_to(w_ih, (B, G))
    b_b = jnp.broadcast_to(b, (B, G))
    w_rows = [jnp.broadcast_to(w_hh[k:k + 1, :], (B, G)) for k in range(H)]

    # Hoist the input contribution + bias entirely off the recurrence chain.
    pre_x = [seq[:, t:t + 1] * w_ih_b + b_b for t in range(T)]

    # h, c live in vregs as loop-carried values (no VMEM scratch round-trips).
    h = jnp.zeros((B, H), jnp.float32)
    c = jnp.zeros((B, H), jnp.float32)

    # T is compile-time static -> fully unrolled recurrence.
    # TODO(synk): for large T, switch to lax.fori_loop(..., unroll=8) to bound
    # code size, and tile T with a BlockSpec grid axis marked "arbitrary".
    for t in range(T):
        # h @ W_hh on the VPU: H broadcast-FMAs in 4 partial sums (no MXU,
        # bit-exact f32, short add chain).  pre_x[t] is folded into partial 0.
        parts = [pre_x[t] + h[:, 0:1] * w_rows[0]]
        parts += [h[:, k:k + 1] * w_rows[k] for k in range(1, 4)]
        for k in range(4, H):
            parts[k % 4] = parts[k % 4] + h[:, k:k + 1] * w_rows[k]
        pre = (parts[0] + parts[1]) + (parts[2] + parts[3])
        sig = jax.nn.sigmoid(pre[:, :3 * H])         # i, f, o in one EUP pass
        g = jnp.tanh(pre[:, 3 * H:])                 # g in one EUP pass
        i_g = sig[:, 0 * H:1 * H]
        f_g = sig[:, 1 * H:2 * H]
        o_g = sig[:, 2 * H:3 * H]
        c = f_g * c + i_g * g
        h = o_g * jnp.tanh(c)

    # Fused decoder heads ([B,H] x [H,384]) on the VPU — bit-exact f32,
    # lane-dense 384-lane output store (rule lanes 0:256, state lane 256).
    dp = dec_ref[...]                                # [H+1, 384]
    b_dec = jnp.broadcast_to(dp[H:H + 1, :], (B, DEC_W))
    dparts = [h[:, k:k + 1] * jnp.broadcast_to(dp[k:k + 1, :], (B, DEC_W))
              for k in range(4)]
    for k in range(4, H):
        dparts[k % 4] = dparts[k % 4] + \
            h[:, k:k + 1] * jnp.broadcast_to(dp[k:k + 1, :], (B, DEC_W))
    out_ref[...] = b_dec + (dparts[0] + dparts[1]) + (dparts[2] + dparts[3])


def encode_decode(params, sequence):
    # sequence: [B, T, 1] (batch_first, like PyTorch).  Drop the trailing unit
    # dim only — no time-major transpose.
    B, T, _ = sequence.shape
    H = HIDDEN
    seq2d = sequence[:, :, 0]                        # [B, T]

    # Plain-JAX parameter prep (tiny, one-shot glue):
    #  * permute gate columns PyTorch [i,f,g,o] -> kernel [i,f,o,g]
    #  * pack [W_hh; W_ih; b] into one [H+2, 4H] slab
    #  * pack the two decoder heads into one [H+1, 384] lane-padded slab
    def perm(w):
        return jnp.concatenate([w[:, :2 * H], w[:, 3 * H:], w[:, 2 * H:3 * H]], axis=1)

    lstm_pack = jnp.concatenate(
        [perm(params["w_hh"]), perm(params["w_ih"]), perm(params["b_lstm"])],
        axis=0).astype(jnp.float32)                                           # [H+2, 4H]

    w_dec = jnp.concatenate([params["w_rule"], params["w_state"]], axis=1)    # [H, 257]
    b_dec = jnp.concatenate([params["b_rule"], params["b_state"]], axis=1)    # [1, 257]
    dec_pack = jnp.concatenate([w_dec, b_dec], axis=0)                        # [H+1, 257]
    dec_pack = jnp.pad(dec_pack,
                       ((0, 0), (0, DEC_W - (NUM_RULES + 1)))).astype(jnp.float32)

    vmem = pl.BlockSpec(memory_space=pltpu.MemorySpace.VMEM)
    dec = pl.pallas_call(
        _lstm_decode_kernel,
        out_shape=jax.ShapeDtypeStruct((B, DEC_W), jnp.float32),
        in_specs=[vmem, vmem, vmem],
        out_specs=vmem,
    )(seq2d, lstm_pack, dec_pack)
    # TODO(synk): when B grows beyond toy size, add a batch grid axis with
    # dimension_semantics=("parallel",) so v7x's two TensorCores split the batch.

    state = dec[:, NUM_RULES:NUM_RULES + 1]          # decoder_state: [B, 1]
    rule = dec[:, :NUM_RULES]                        # decoder_rule:  [B, 256]
    return state, rule


# ----------------------------------------------------------------------------
# Module wrapper (mirrors DualDirectionalCANetwork.forward)
# ----------------------------------------------------------------------------
def dual_directional_ca_forward(params, x, sequence=None):
    if sequence is None:
        return forward_net(params, x)
    return encode_decode(params, sequence)


# ----------------------------------------------------------------------------
# Deterministic parameter init (same shapes/semantics as the PyTorch module,
# stored transposed to [in, out]; LSTM gate order is canonical i, f, g, o).
# ----------------------------------------------------------------------------
def init_params(key):
    ks = jax.random.split(key, 12)

    def u(k, shape, fan_in):
        bound = 1.0 / jnp.sqrt(jnp.float32(fan_in))
        return jax.random.uniform(k, shape, jnp.float32, -bound, bound)

    H = HIDDEN
    return {
        # forward_net: Linear(3,10), Linear(10,1)
        "w1": u(ks[0], (3, 10), 3),
        "b1": u(ks[1], (1, 10), 3),
        "w2": u(ks[2], (1, 10), 10),        # Linear(10,1).weight stored as a row
        "b2": u(ks[3], (1, 1), 10),
        # LSTM(input=1, hidden=20): transposed [in, 4H], gate order i, f, g, o
        "w_ih": u(ks[4], (1, 4 * H), H),
        "w_hh": u(ks[5], (H, 4 * H), H),
        "b_lstm": u(ks[6], (1, 4 * H), H) + u(ks[7], (1, 4 * H), H),   # b_ih + b_hh
        # decoder_state: Linear(20,1);  decoder_rule: Linear(20, num_rules)
        "w_state": u(ks[8], (H, 1), H),
        "b_state": u(ks[9], (1, 1), H),
        "w_rule": u(ks[10], (H, NUM_RULES), H),
        "b_rule": u(ks[11], (1, NUM_RULES), H),
    }


# ----------------------------------------------------------------------------
# Pure-JAX reference for correctness checking (canonical PyTorch gate order)
# ----------------------------------------------------------------------------
def ref_forward_net(params, x):
    h = jnp.maximum(x @ params["w1"] + params["b1"], 0.0)
    return jax.nn.sigmoid(h @ params["w2"].T + params["b2"])


def ref_encode_decode(params, sequence):
    B, T, _ = sequence.shape
    H = HIDDEN
    h = jnp.zeros((B, H), jnp.float32)
    c = jnp.zeros((B, H), jnp.float32)
    for t in range(T):
        x_t = sequence[:, t, :]
        gates = x_t @ params["w_ih"] + h @ params["w_hh"] + params["b_lstm"]
        i = jax.nn.sigmoid(gates[:, 0 * H:1 * H])
        f = jax.nn.sigmoid(gates[:, 1 * H:2 * H])
        g = jnp.tanh(gates[:, 2 * H:3 * H])
        o = jax.nn.sigmoid(gates[:, 3 * H:4 * H])
        c = f * c + i * g
        h = o * jnp.tanh(c)
    state = h @ params["w_state"] + params["b_state"]
    rule = h @ params["w_rule"] + params["b_rule"]
    return state, rule


if __name__ == "__main__":
    key = jax.random.PRNGKey(0)
    pkey, xkey, skey = jax.random.split(key, 3)
    params = init_params(pkey)

    B, T = 8, 8
    x = jax.random.normal(xkey, (B, 3), jnp.float32)
    sequence = jax.random.normal(skey, (B, T, 1), jnp.float32)

    # Branch 1: forward_net(x)
    y = dual_directional_ca_forward(params, x)
    y = jax.block_until_ready(y)

    # Branch 2: LSTM encoder + decoders
    prev_state, rule = dual_directional_ca_forward(params, x, sequence)
    prev_state = jax.block_until_ready(prev_state)
    rule = jax.block_until_ready(rule)

    # Correctness vs. pure-JAX reference
    y_ref = ref_forward_net(params, x)
    state_ref, rule_ref = ref_encode_decode(params, sequence)
    assert y.shape == (B, 1) and prev_state.shape == (B, 1) and rule.shape == (B, NUM_RULES)
    assert jnp.allclose(y, y_ref, atol=1e-4), "forward_net mismatch"
    assert jnp.allclose(prev_state, state_ref, atol=1e-4), "decoder_state mismatch"
    assert jnp.allclose(rule, rule_ref, atol=1e-4), "decoder_rule mismatch"

    print("KERNEL_OK")
</pallas_src>

<mosaic_0001>
module attributes {stable_mosaic.version = 11 : i64} {
  func.func @_forward_net_kernel(%arg0: memref<8x3xf32, #tpu.memory_space<vmem>>, %arg1: memref<6x10xf32, #tpu.memory_space<vmem>>, %arg2: memref<8x1xf32, #tpu.memory_space<vmem>>) attributes {dimension_semantics = [], scalar_prefetch = 0 : i64, scratch_operands = 0 : i64, tpu.core_type = #tpu.core_type<tc>} {
    %c0 = arith.constant 0 : index
    %c0_0 = arith.constant 0 : index
    %0 = vector.load %arg0[%c0, %c0_0] : memref<8x3xf32, #tpu.memory_space<vmem>>, vector<8x3xf32>
    %c0_1 = arith.constant 0 : index
    %c0_2 = arith.constant 0 : index
    %1 = vector.load %arg1[%c0_1, %c0_2] : memref<6x10xf32, #tpu.memory_space<vmem>>, vector<6x10xf32>
    %2 = vector.extract_strided_slice %1 {offsets = [0, 0], sizes = [3, 10], strides = [1, 1]} : vector<6x10xf32> to vector<3x10xf32>
    %3 = vector.extract_strided_slice %1 {offsets = [3, 0], sizes = [1, 10], strides = [1, 1]} : vector<6x10xf32> to vector<1x10xf32>
    %4 = vector.extract_strided_slice %1 {offsets = [4, 0], sizes = [1, 10], strides = [1, 1]} : vector<6x10xf32> to vector<1x10xf32>
    %5 = vector.extract_strided_slice %1 {offsets = [5, 0], sizes = [1, 1], strides = [1, 1]} : vector<6x10xf32> to vector<1x1xf32>
    %6 = vector.extract_strided_slice %0 {offsets = [0, 0], sizes = [8, 1], strides = [1, 1]} : vector<8x3xf32> to vector<8x1xf32>
    %7 = vector.extract_strided_slice %2 {offsets = [0, 0], sizes = [1, 10], strides = [1, 1]} : vector<3x10xf32> to vector<1x10xf32>
    %8 = vector.broadcast %6 : vector<8x1xf32> to vector<8x10xf32>
    %9 = vector.broadcast %7 : vector<1x10xf32> to vector<8x10xf32>
    %10 = arith.mulf %8, %9 : vector<8x10xf32>
    %11 = vector.broadcast %3 : vector<1x10xf32> to vector<8x10xf32>
    %12 = arith.addf %11, %10 : vector<8x10xf32>
    %13 = vector.extract_strided_slice %0 {offsets = [0, 1], sizes = [8, 1], strides = [1, 1]} : vector<8x3xf32> to vector<8x1xf32>
    %14 = vector.extract_strided_slice %2 {offsets = [1, 0], sizes = [1, 10], strides = [1, 1]} : vector<3x10xf32> to vector<1x10xf32>
    %15 = vector.broadcast %13 : vector<8x1xf32> to vector<8x10xf32>
    %16 = vector.broadcast %14 : vector<1x10xf32> to vector<8x10xf32>
    %17 = arith.mulf %15, %16 : vector<8x10xf32>
    %18 = arith.addf %12, %17 : vector<8x10xf32>
    %19 = vector.extract_strided_slice %0 {offsets = [0, 2], sizes = [8, 1], strides = [1, 1]} : vector<8x3xf32> to vector<8x1xf32>
    %20 = vector.extract_strided_slice %2 {offsets = [2, 0], sizes = [1, 10], strides = [1, 1]} : vector<3x10xf32> to vector<1x10xf32>
    %21 = vector.broadcast %19 : vector<8x1xf32> to vector<8x10xf32>
    %22 = vector.broadcast %20 : vector<1x10xf32> to vector<8x10xf32>
    %23 = arith.mulf %21, %22 : vector<8x10xf32>
    %24 = arith.addf %18, %23 : vector<8x10xf32>
    %cst = arith.constant 0.000000e+00 : f32
    %25 = vector.broadcast %cst : f32 to vector<8x10xf32>
    %26 = arith.maximumf %24, %25 : vector<8x10xf32>
    %27 = vector.broadcast %4 : vector<1x10xf32> to vector<8x10xf32>
    %28 = arith.mulf %26, %27 : vector<8x10xf32>
    %cst_3 = arith.constant dense<0.000000e+00> : vector<8xf32>
    %29 = vector.multi_reduction <add>, %28, %cst_3 [1] : vector<8x10xf32> to vector<8xf32>
    %30 = vector.shape_cast %29 : vector<8xf32> to vector<8x1xf32>
    %31 = vector.broadcast %5 : vector<1x1xf32> to vector<8x1xf32>
    %32 = arith.addf %30, %31 : vector<8x1xf32>
    %33 = arith.negf %32 : vector<8x1xf32>
    %34 = math.exp %33 : vector<8x1xf32>
    %cst_4 = arith.constant 1.000000e+00 : f32
    %35 = vector.broadcast %cst_4 : f32 to vector<8x1xf32>
    %36 = arith.addf %35, %34 : vector<8x1xf32>
    %37 = arith.divf %35, %36 : vector<8x1xf32>
    %c0_5 = arith.constant 0 : index
    %c0_6 = arith.constant 0 : index
    %38 = vector.load %arg2[%c0_5, %c0_6] : memref<8x1xf32, #tpu.memory_space<vmem>>, vector<8x1xf32>
    tpu.vector_store %arg2[%c0_5, %c0_6], %37 {strides = array<i32>} : memref<8x1xf32, #tpu.memory_space<vmem>>, vector<8x1xf32>,
    return
  }
}

</mosaic_0001>

<llo_original>
// kernel: tpu_custom_call.1
$region0: #{tpu_custom_call.1}
  #allocation0 [shape = 'u32[]', space=smem, size = 0x4, offset = 0x4, fixed_abs, tag = 'smem constant byte address 0x4 - core index']
  #allocation1 [shape = 'u32[144,128]{1,0:T(1,128)}', space=vmem, size = 0x12000, scoped, tag = 'internal scratch']
  %s0 = inlined_call_operand.vmem [shape: f32[8,3], index: 0, kind: input, shape index: {}]
  %s1 = inlined_call_operand.vmem [shape: f32[6,10], index: 1, kind: input, shape index: {}]
  %s2 = inlined_call_operand.vmem [shape: f32[8,1], index: 2, kind: output, shape index: {}]
  %s3 = sld [smem:[#allocation0]]
  $region18: #{tpu_custom_call.1} parent=0
    _
  %s5 = ssub.s32 1, %s3
  %s6 = scalar_select 0, %s5, %s3
  // Predicated region
  $region2: #{tpu_custom_call.1} parent=0 // pred_check
    _
  $region3: #{tpu_custom_call.1} parent=0 // pred_check_branch
    %8 = sbr.rel (0) target = $region5
  $region4: #{tpu_custom_call.1} parent=0 // pred_region
    _
  $region5: #{tpu_custom_call.1} parent=0 // pred_fallthru
    _
  // Predicated region
  $region6: #{tpu_custom_call.1} parent=0 // pred_check
    _
  $region7: #{tpu_custom_call.1} parent=0 // pred_check_branch
    %10 = sbr.rel (0) target = $region9
  $region8: #{tpu_custom_call.1} parent=0 // pred_region
    _
  $region9: #{tpu_custom_call.1} parent=0 // pred_fallthru
    _
  %v11 = vld [vmem:[%s0] sm:$0xff]
  %v12 = vld [vmem:[%s1] sm:$0x3f]
  %14 = vset.pattern.permute.xlu0 0
  %15 = vperm.xlu0 %14, %v11
  %v16 = vpop.permute.xlu0 %15
  %v18 = vlaneseq
  %v19 = vshrl.u32 %v18, 7
  %v20 = vsub.s32 0, %v19
  %v21 = vrot.slane %v12, %v20
  %v22 = vmul.f32 %v16, %v21
  %v23 = vlaneseq
  %v24 = vshrl.u32 %v23, 7
  %v25 = vsub.s32 3, %v24
  %v26 = vrot.slane %v12, %v25
  %v27 = vadd.f32 %v26, %v22
  %28 = vset.pattern.permute.xlu0 1
  %29 = vperm.xlu0 %28, %v11
  %v30 = vpop.permute.xlu0 %29
  %v32 = vlaneseq
  %v33 = vshrl.u32 %v32, 7
  %v34 = vsub.s32 1, %v33
  %v35 = vrot.slane %v12, %v34
  %v36 = vmul.f32 %v30, %v35
  %v37 = vadd.f32 %v27, %v36
  %38 = vset.pattern.permute.xlu0 2
  %39 = vperm.xlu0 %38, %v11
  %v40 = vpop.permute.xlu0 %39
  %v42 = vlaneseq
  %v43 = vshrl.u32 %v42, 7
  %v44 = vsub.s32 2, %v43
  %v45 = vrot.slane %v12, %v44
  %v46 = vmul.f32 %v40, %v45
  %v47 = vadd.f32 %v37, %v46
  %v48 = vmax.f32 %v47, 0.0
  %v49 = vlaneseq
  %v50 = vshrl.u32 %v49, 7
  %v51 = vsub.s32 4, %v50
  %v52 = vrot.slane %v12, %v51
  %v53 = vmul.f32 %v48, %v52
  %vm54 = vcmask 80896
  %v55 = vsel %vm54, %v53, 0.0
  %56 = vadd.xlane.f32.xlu0 %v55
  %v57 = vpop.xlane.xlu0 %56
  %v58 = vlaneseq
  %v59 = vshrl.u32 %v58, 7
  %v60 = vsub.s32 5, %v59
  %v61 = vrot.slane %v12, %v60
  %v62 = vadd.f32 %v57, %v61
  %v63 = vxor.u32 %v62, 2147483648
  %v64 = vmul.f32 %v63, 1.442695
  %v65 = vpow.pop %v64
  %v66 = vadd.f32 %v65, 1.0
  %v67 = vrcp.pop %v66
  %v68 = vmul.f32 1.0, %v67
  %vm69 = vcmask 7168
  %70 = vst.msk [vmem:[%s2] sm:$0xff] %vm69, %v68
  // Predicated region
  $region10: #{tpu_custom_call.1} parent=0 // pred_check
    _
  $region11: #{tpu_custom_call.1} parent=0 // pred_check_branch
    %72 = sbr.rel (0) target = $region13
  $region12: #{tpu_custom_call.1} parent=0 // pred_region
    _
  $region13: #{tpu_custom_call.1} parent=0 // pred_fallthru
    _
  // Predicated region
  $region14: #{tpu_custom_call.1} parent=0 // pred_check
    _
  $region15: #{tpu_custom_call.1} parent=0 // pred_check_branch
    %74 = sbr.rel (0) target = $region17
  $region16: #{tpu_custom_call.1} parent=0 // pred_region
    _
  $region17: #{tpu_custom_call.1} parent=0 // pred_fallthru
    _

</llo_original>
